<compile_context>
chip_gen: v5e
topology: v5e:2x2
jax: 0.10.0
libtpu: 0.0.40
codegen_flags: <defaults>
</compile_context>

<pallas_src>
import functools

import jax
import jax.numpy as jnp
from jax.experimental import pallas as pl
from jax.experimental.pallas import tpu as pltpu


# ----------------------------------------------------------------------------
# Kernel body
# ----------------------------------------------------------------------------
def _mean_act_kernel(x_ref, o_ref, *, compute_dtype):
    y = jnp.exp(x_ref[...].astype(compute_dtype))
    y = jnp.clip(y, 0.001, 1000.0)
    o_ref[...] = y.astype(o_ref.dtype)


# ----------------------------------------------------------------------------
# Wrapper helpers
# ----------------------------------------------------------------------------
def _cdiv(a, b):
    return -(-a // b)


def _round_down(v, m):
    return (v // m) * m


def _compute_dtype_for(dtype):
    """Native-dtype exp/clip on v6e/v7x; upcast sub-32-bit to f32 on v5e/older."""
    if jnp.dtype(dtype).itemsize >= 4:
        return dtype
    try:
        kind = jax.devices()[0].device_kind.lower()
    except Exception:
        kind = ""
    if any(tag in kind for tag in ("v2", "v3", "v4", "v5")):
        return jnp.float32  # no bf16 VPU/EUP path on these generations
    return dtype


def _pick_tiles(M, N, itemsize, budget_bytes):
    """Pick (tm, tn) so each block is ~budget_bytes and layout rules hold."""
    # Lane tile: keep the full last dim unless even an 8-row stripe of it
    # would blow the per-block budget; then tile lanes in 128-multiples.
    if 8 * N * itemsize <= budget_bytes or N <= 128:
        tn = N
    else:
        tn = max(128, min(4096, _round_down(budget_bytes // (8 * itemsize), 128)))
    # Row tile from the byte budget; multiple of 8 unless it covers all rows.
    tm = max(8, _round_down(budget_bytes // max(tn * itemsize, 1), 8))
    if tm >= M:
        tm = M  # full-extent block (satisfies the layout rule by "full dim")
    # Megacore (v7x): make sure there are >= 2 blocks to split when there is
    # enough work; a 1-step grid would leave the second TensorCore idle.
    if _cdiv(M, tm) * _cdiv(N, tn) < 2 and M > 8:
        tm = max(8, _round_down(_cdiv(M, 2), 8))
    return tm, tn


# ----------------------------------------------------------------------------
# Public op
# ----------------------------------------------------------------------------
def mean_act(x, *, block_budget_bytes=2 * 1024 * 1024, donate_input=False):
    """MeanAct: clamp(exp(x), 0.001, 1000.0), elementwise, any shape."""
    orig_shape = x.shape
    orig_dtype = x.dtype

    # Flatten to 2-D [rows, lanes]; keep the last dim on lanes. No padding.
    if x.ndim == 0:
        x2 = x.reshape(1, 1)
    elif x.ndim == 1:
        x2 = x.reshape(1, -1)
    else:
        x2 = x.reshape(-1, orig_shape[-1])
    M, N = x2.shape

    itemsize = jnp.dtype(orig_dtype).itemsize
    tm, tn = _pick_tiles(M, N, itemsize, block_budget_bytes)
    grid = (_cdiv(M, tm), _cdiv(N, tn))

    kernel = functools.partial(
        _mean_act_kernel, compute_dtype=_compute_dtype_for(orig_dtype)
    )

    out = pl.pallas_call(
        kernel,
        grid=grid,
        in_specs=[pl.BlockSpec((tm, tn), lambda i, j: (i, j))],
        out_specs=pl.BlockSpec((tm, tn), lambda i, j: (i, j)),
        out_shape=jax.ShapeDtypeStruct((M, N), orig_dtype),
        # Same shape & dtype => aliasing is legal; only useful when the caller
        # no longer needs x (saves an HBM allocation, not bandwidth).
        input_output_aliases=({0: 0} if donate_input else {}),
        compiler_params=pltpu.CompilerParams(
            dimension_semantics=("parallel", "parallel"),  # megacore on v7x
        ),
    )(x2)

    return out.reshape(orig_shape)


# ----------------------------------------------------------------------------
if __name__ == "__main__":
    # Shapes consistent with how BioBatchNet applies MeanAct:
    # a (batch, genes) activation from the decoder's mean head.
    B, G = 2, 64
    key = jax.random.PRNGKey(0)
    x = jax.random.normal(key, (B, G), jnp.float32) * 4.0  # exercise the clamp

    fn = jax.jit(mean_act)
    y = jax.block_until_ready(fn(x))

    y_ref = jnp.clip(jnp.exp(x), 0.001, 1000.0)
    assert y.shape == (B, G)
    assert y.dtype == x.dtype
    assert jnp.allclose(y, y_ref, rtol=1e-5, atol=1e-6), "mismatch vs reference"

    # Larger, non-(8,128)-aligned shape: exercises ragged-edge masking and the
    # multi-row-block grid (>= 2 blocks for the v7x megacore path).
    x2 = jax.random.normal(jax.random.PRNGKey(1), (1000, 1000), jnp.float32) * 6.0
    y2 = jax.block_until_ready(fn(x2))
    y2_ref = jnp.clip(jnp.exp(x2), 0.001, 1000.0)
    assert jnp.allclose(y2, y2_ref, rtol=1e-5, atol=1e-6), "mismatch vs reference (tiled)"

    print("KERNEL_OK")
</pallas_src>

<mosaic_0001>
module attributes {stable_mosaic.version = 11 : i64} {
  func.func @_mean_act_kernel(%arg0: i32, %arg1: i32, %arg2: memref<2x64xf32, #tpu.memory_space<vmem>>, %arg3: memref<2x64xf32, #tpu.memory_space<vmem>>) attributes {dimension_semantics = [#tpu.dimension_semantics<parallel>, #tpu.dimension_semantics<parallel>], iteration_bounds = array<i64: 1, 1>, scalar_prefetch = 0 : i64, scratch_operands = 0 : i64, tpu.core_type = #tpu.core_type<tc>, window_params = [{transform_indices = @transform_0, window_bounds = array<i64: 2, 64>}, {transform_indices = @transform_1, window_bounds = array<i64: 2, 64>}]} {
    %c0 = arith.constant 0 : index
    %c0_0 = arith.constant 0 : index
    %0 = vector.load %arg2[%c0, %c0_0] : memref<2x64xf32, #tpu.memory_space<vmem>>, vector<2x64xf32>
    %1 = math.exp %0 : vector<2x64xf32>
    %cst = arith.constant 1.000000e-03 : f32
    %cst_1 = arith.constant 1.000000e+03 : f32
    %2 = vector.broadcast %cst : f32 to vector<2x64xf32>
    %3 = arith.maximumf %2, %1 : vector<2x64xf32>
    %4 = vector.broadcast %cst_1 : f32 to vector<2x64xf32>
    %5 = arith.minimumf %4, %3 : vector<2x64xf32>
    %c0_2 = arith.constant 0 : index
    %c0_3 = arith.constant 0 : index
    %6 = vector.load %arg3[%c0_2, %c0_3] : memref<2x64xf32, #tpu.memory_space<vmem>>, vector<2x64xf32>
    tpu.vector_store %arg3[%c0_2, %c0_3], %5 {strides = array<i32>} : memref<2x64xf32, #tpu.memory_space<vmem>>, vector<2x64xf32>,
    return
  }
  func.func @transform_0(%arg0: i32, %arg1: i32) -> (i32, i32) {
    %c0_i32 = arith.constant 0 : i32
    return %arg0, %arg1 : i32, i32
  }
  func.func @transform_1(%arg0: i32, %arg1: i32) -> (i32, i32) {
    %c0_i32 = arith.constant 0 : i32
    return %arg0, %arg1 : i32, i32
  }
}

</mosaic_0001>

<llo_original>
// kernel: mean_act.1
$region0: #{mean_act.1}
  #allocation0 [shape = 'u32[]', space=smem, size = 0x4, offset = 0x4, fixed_abs, tag = 'smem constant byte address 0x4 - core index']
  #allocation1 [shape = 'u32[72,128]{1,0:T(1,128)}', space=vmem, size = 0x9000, scoped, tag = 'internal scratch']
  %s0 = inlined_call_operand.hbm [shape: f32[2,64], index: 0, kind: input, shape index: {}]
  %s1 = inlined_call_operand.hbm [shape: f32[2,64], index: 1, kind: output, shape index: {}]
  %s2 = sld [smem:[#allocation0]]
  $region18: #{mean_act.1} parent=0
    _
  %s4 = ssub.s32 1, %s2
  %s5 = scalar_select 0, %s4, %s2
  $region1: #{mean_act.1} parent=0
    #allocation2 [shape = 'u8[1024]{0}', space=vmem, size = 0x400, scoped, tag = 'input window, operand 0, single buffered']
    #allocation3 [shape = 's32[1]{0}', space=sflag, size = 0x4, scoped, tag = 'scoped memory for mean_act.1']
    #allocation4 [shape = 's32[1]{0}', space=sflag, size = 0x4, scoped, tag = 'scoped memory for mean_act.1']
    #allocation5 [shape = 'u8[1024]{0}', space=vmem, size = 0x400, scoped, tag = 'output window, operand 0, single buffered']
    %6 = vsyncpa [#allocation3], 0
    %7 = vsyncpa [#allocation4], 0
    // Predicated region
    $region2: #{mean_act.1} parent=1 // pred_check
      _
    $region3: #{mean_act.1} parent=1 // pred_check_branch
      %9 = sbr.rel (0) target = $region5
    $region4: #{mean_act.1} parent=1 // pred_region
      %11 = vsyncadd [#allocation3], 0
      %s13 = sshll.u32 %s0, 4
      %s14 = int_to_ptr.hbm [resolvable:$true] %s13
      %s15 = sshll.u32 [#allocation2], 4
      %s16 = int_to_ptr.vmem [resolvable:$true] %s15
      %18 = dma.hbm_to_vmem [thread:$0]  %s14, 32, %s16, [#allocation3]
    $region5: #{mean_act.1} parent=1 // pred_fallthru
      _
    // Predicated region
    $region6: #{mean_act.1} parent=1 // pred_check
      _
    $region7: #{mean_act.1} parent=1 // pred_check_branch
      %20 = sbr.rel (0) target = $region9
    $region8: #{mean_act.1} parent=1 // pred_region
      %22 = dma.done [#allocation3], 32
    $region9: #{mean_act.1} parent=1 // pred_fallthru
      _
    %v23 = vld [vmem:[#allocation2] sm:$0x3]
    %v24 = vmul.f32 %v23, 1.442695
    %v25 = vpow.pop %v24
    %v26 = vmax.f32 %v25, 0.001
    %v27 = vmin.f32 %v26, 1000.0
    %vm28 = vcmask 517120
    %29 = vst.msk [vmem:[#allocation5] sm:$0x3] %vm28, %v27
    // Predicated region
    $region10: #{mean_act.1} parent=1 // pred_check
      _
    $region11: #{mean_act.1} parent=1 // pred_check_branch
      %31 = sbr.rel (0) target = $region13
    $region12: #{mean_act.1} parent=1 // pred_region
      %33 = vsyncadd [#allocation4], 0
      %s35 = sshll.u32 [#allocation5], 4
      %s36 = int_to_ptr.vmem [resolvable:$true] %s35
      %s37 = sshll.u32 %s1, 4
      %s38 = int_to_ptr.hbm [resolvable:$true] %s37
      %40 = dma.vmem_to_hbm [thread:$0]  %s36, 32, %s38, [#allocation4]
    $region13: #{mean_act.1} parent=1 // pred_fallthru
      _
    // Predicated region
    $region14: #{mean_act.1} parent=1 // pred_check
      _
    $region15: #{mean_act.1} parent=1 // pred_check_branch
      %42 = sbr.rel (0) target = $region17
    $region16: #{mean_act.1} parent=1 // pred_region
      %44 = dma.done [#allocation4], 32
    $region17: #{mean_act.1} parent=1 // pred_fallthru
      _
    %45 = vsyncpa [#allocation3], 1
    %46 = vsyncpa [#allocation4], 1

</llo_original>
